<compile_context>
chip_gen: v7x
topology: tpu7x:2x2x1
jax: 0.10.0
libtpu: 0.0.40
codegen_flags: <defaults>
</compile_context>

<pallas_src>
import functools

import jax
import jax.numpy as jnp
from jax import lax
from jax.experimental import pallas as pl
from jax.experimental.pallas import tpu as pltpu


def _round_up(x: int, m: int) -> int:
    return (x + m - 1) // m * m


# ----------------------------- CE kernel -------------------------------------

def _ce_tile_kernel(logits_ref, target_ref, out_ref, acc_ref, *, n_rows, inv_n):
    """Per-tile softmax cross entropy; class index = argmax(target, 1)
    (first maximum, matching torch.argmax)."""
    i = pl.program_id(0)

    @pl.when(i == 0)
    def _():
        acc_ref[...] = jnp.zeros_like(acc_ref)

    logits = logits_ref[...].astype(jnp.float32)          # [TN, Cp]
    target = target_ref[...].astype(jnp.float32)          # [TN, Cp]
    tn, cp = logits.shape

    # stable log-sum-exp per row (padded lanes hold -1e30 -> exp underflows to 0)
    row_max = jnp.max(logits, axis=1, keepdims=True)                       # [TN, 1]
    lse = row_max + jnp.log(
        jnp.sum(jnp.exp(logits - row_max), axis=1, keepdims=True))         # [TN, 1]

    # torch.argmax(target, 1): first index of the row maximum
    col = lax.broadcasted_iota(jnp.int32, (tn, cp), 1)                      # [TN, Cp]
    t_max = jnp.max(target, axis=1, keepdims=True)
    first_idx = jnp.min(jnp.where(target == t_max, col, cp),
                        axis=1, keepdims=True)                              # [TN, 1]

    # gather logits[r, argmax_r] via one-hot select (no cross-lane gather)
    sel = jnp.sum(jnp.where(col == first_idx, logits, 0.0),
                  axis=1, keepdims=True)                                    # [TN, 1]

    # mask out batch-padding rows in the last tile
    row_ids = i * tn + lax.broadcasted_iota(jnp.int32, (tn, 1), 0)
    tile_sum = jnp.sum(jnp.where(row_ids < n_rows, lse - sel, 0.0))

    acc_ref[...] = acc_ref[...] + jnp.reshape(tile_sum, (1, 1))

    @pl.when(i == pl.num_programs(0) - 1)
    def _():
        out_ref[...] = acc_ref[...] * inv_n


def _ce_loss(logits, target):
    n, c = logits.shape
    c_pad = _round_up(max(c, 128), 128)

    # row-tile from a ~1 MiB / buffer budget (safe on v5e/v6e/v7x scoped VMEM)
    tn = max(8, min(1024, ((1 << 20) // (c_pad * 4)) // 8 * 8))
    tn = min(tn, _round_up(n, 8))
    n_pad = _round_up(n, tn)

    neg = -1e30  # never wins max/argmax; exp() underflows to exactly 0
    logits_p = jnp.pad(logits, ((0, n_pad - n), (0, c_pad - c)),
                       constant_values=neg)
    target_p = jnp.pad(target, ((0, n_pad - n), (0, c_pad - c)),
                       constant_values=neg)

    cost = pl.CostEstimate(
        flops=int(10 * n * c),
        transcendentals=int(2 * n * c),
        bytes_accessed=int(n * c * jnp.dtype(logits.dtype).itemsize
                           + n * c * jnp.dtype(target.dtype).itemsize + 4),
    )

    kernel = functools.partial(_ce_tile_kernel, n_rows=n, inv_n=1.0 / n)
    out = pl.pallas_call(
        kernel,
        out_shape=jax.ShapeDtypeStruct((1, 1), jnp.float32),
        grid_spec=pltpu.PrefetchScalarGridSpec(
            num_scalar_prefetch=0,
            grid=(n_pad // tn,),
            in_specs=[
                pl.BlockSpec((tn, c_pad), lambda i: (i, 0)),
                pl.BlockSpec((tn, c_pad), lambda i: (i, 0)),
            ],
            out_specs=pl.BlockSpec((1, 1), lambda i: (0, 0)),
            scratch_shapes=[pltpu.VMEM((1, 1), jnp.float32)],
        ),
        compiler_params=pltpu.CompilerParams(
            dimension_semantics=("arbitrary",),   # grid axis is a reduction
        ),
        cost_estimate=cost,
    )(logits_p, target_p)
    return out[0, 0]


# ----------------------------- BCE kernel ------------------------------------

def _bce_tile_kernel(p_ref, t_ref, out_ref, acc_ref, *, n_elems, inv_n):
    """Per-tile BCELoss partial sum; log terms clamped at -100 like torch."""
    i = pl.program_id(0)

    @pl.when(i == 0)
    def _():
        acc_ref[...] = jnp.zeros_like(acc_ref)

    p = p_ref[...].astype(jnp.float32)                    # [TR, LANE]
    t = t_ref[...].astype(jnp.float32)
    tr, lanes = p.shape

    log_p = jnp.maximum(jnp.log(p), -100.0)
    log_1mp = jnp.maximum(jnp.log(1.0 - p), -100.0)       # matches torch's clamp
    elem = -(t * log_p + (1.0 - t) * log_1mp)

    # mask out the flatten / tile padding at the tail of the buffer
    row_ids = i * tr + lax.broadcasted_iota(jnp.int32, (tr, lanes), 0)
    col_ids = lax.broadcasted_iota(jnp.int32, (tr, lanes), 1)
    valid = (row_ids * lanes + col_ids) < n_elems
    tile_sum = jnp.sum(jnp.where(valid, elem, 0.0))

    acc_ref[...] = acc_ref[...] + jnp.reshape(tile_sum, (1, 1))

    @pl.when(i == pl.num_programs(0) - 1)
    def _():
        out_ref[...] = acc_ref[...] * inv_n


def _bce_loss(proba, target):
    n, c = proba.shape
    total = n * c

    LANE = 1024                        # lane-dense layout: unmasked full-width loads
    rows = _round_up(total, LANE) // LANE
    tr = 256 if rows >= 256 else max(8, _round_up(rows, 8))
    rows_pad = _round_up(rows, tr)
    pad = rows_pad * LANE - total

    p2 = jnp.pad(proba.reshape(-1), (0, pad),
                 constant_values=0.5).reshape(rows_pad, LANE)
    t2 = jnp.pad(target.reshape(-1), (0, pad),
                 constant_values=0.0).reshape(rows_pad, LANE)

    cost = pl.CostEstimate(
        flops=int(8 * total),
        transcendentals=int(2 * total),
        bytes_accessed=int(total * jnp.dtype(proba.dtype).itemsize
                           + total * jnp.dtype(target.dtype).itemsize + 4),
    )

    kernel = functools.partial(_bce_tile_kernel, n_elems=total, inv_n=1.0 / total)
    out = pl.pallas_call(
        kernel,
        out_shape=jax.ShapeDtypeStruct((1, 1), jnp.float32),
        grid_spec=pltpu.PrefetchScalarGridSpec(
            num_scalar_prefetch=0,
            grid=(rows_pad // tr,),
            in_specs=[
                pl.BlockSpec((tr, LANE), lambda i: (i, 0)),
                pl.BlockSpec((tr, LANE), lambda i: (i, 0)),
            ],
            out_specs=pl.BlockSpec((1, 1), lambda i: (0, 0)),
            scratch_shapes=[pltpu.VMEM((1, 1), jnp.float32)],
        ),
        compiler_params=pltpu.CompilerParams(
            dimension_semantics=("arbitrary",),
        ),
        cost_estimate=cost,
    )(p2, t2)
    return out[0, 0]


# ----------------------------- module wrapper ---------------------------------

class ResNetLossPallas:
    """JAX/Pallas equivalent of the PyTorch ResNetLoss module."""

    def __init__(self, loss_type="ce"):
        self.loss_type = loss_type

    def __call__(self, input_dict, target):
        if self.loss_type == "ce":
            return _ce_loss(input_dict["logits"], target)
        elif self.loss_type == "bce":
            return _bce_loss(input_dict["multilabel_proba"], target)
        raise ValueError(f"unknown loss_type {self.loss_type!r}")


# ----------------------------- demo ------------------------------------------

if __name__ == "__main__":
    key = jax.random.PRNGKey(0)
    k1, k2, k3, k4 = jax.random.split(key, 4)

    # small, deliberately non-aligned shapes to exercise padding / masking
    N, C = 10, 40

    # --- CE path ---
    logits = jax.random.normal(k1, (N, C), dtype=jnp.float32)
    tgt_idx = jax.random.randint(k2, (N,), 0, C)
    target_ce = jax.nn.one_hot(tgt_idx, C, dtype=jnp.float32)

    ce_out = ResNetLossPallas("ce")({"logits": logits}, target_ce)
    jax.block_until_ready(ce_out)

    ref_ce = jnp.mean(
        jax.nn.logsumexp(logits, axis=1) - logits[jnp.arange(N), tgt_idx]
    )
    assert jnp.allclose(ce_out, ref_ce, atol=1e-5, rtol=1e-5), (ce_out, ref_ce)

    # --- BCE path ---
    proba = jax.nn.sigmoid(jax.random.normal(k3, (N, C), dtype=jnp.float32))
    target_bce = (jax.random.uniform(k4, (N, C)) > 0.5).astype(jnp.float32)

    bce_out = ResNetLossPallas("bce")({"multilabel_proba": proba}, target_bce)
    jax.block_until_ready(bce_out)

    ref_bce = jnp.mean(
        -(target_bce * jnp.maximum(jnp.log(proba), -100.0)
          + (1.0 - target_bce) * jnp.maximum(jnp.log(1.0 - proba), -100.0))
    )
    assert jnp.allclose(bce_out, ref_bce, atol=1e-5, rtol=1e-5), (bce_out, ref_bce)

    print("KERNEL_OK")
</pallas_src>

<mosaic_0001>
module attributes {stable_mosaic.version = 11 : i64} {
  func.func @_ce_tile_kernel(%arg0: i32, %arg1: memref<16x128xf32, #tpu.memory_space<vmem>>, %arg2: memref<16x128xf32, #tpu.memory_space<vmem>>, %arg3: memref<1x1xf32, #tpu.memory_space<vmem>>, %arg4: memref<1x1xf32, #tpu.memory_space<vmem>>) attributes {dimension_semantics = [#tpu.dimension_semantics<arbitrary>], iteration_bounds = array<i64: 1>, scalar_prefetch = 0 : i64, scratch_operands = 1 : i64, tpu.core_type = #tpu.core_type<tc>, window_params = [{transform_indices = @transform_0, window_bounds = array<i64: 16, 128>}, {transform_indices = @transform_1, window_bounds = array<i64: 16, 128>}, {pipeline_mode = #tpu.pipeline_mode<synchronous>, transform_indices = @transform_2, window_bounds = array<i64: 1, 1>}]} {
    %c0_i32 = arith.constant 0 : i32
    %0 = arith.cmpi eq, %arg0, %c0_i32 : i32
    %1 = arith.extui %0 : i1 to i32
    %c0_i32_0 = arith.constant 0 : i32
    %2 = arith.cmpi ne, %1, %c0_i32_0 : i32
    scf.if %2 {
      %cst_17 = arith.constant 0.000000e+00 : f32
      %49 = vector.broadcast %cst_17 : f32 to vector<1x1xf32>
      %c0_18 = arith.constant 0 : index
      %c0_19 = arith.constant 0 : index
      %50 = vector.load %arg4[%c0_18, %c0_19] : memref<1x1xf32, #tpu.memory_space<vmem>>, vector<1x1xf32>
      tpu.vector_store %arg4[%c0_18, %c0_19], %49 {strides = array<i32>} : memref<1x1xf32, #tpu.memory_space<vmem>>, vector<1x1xf32>,
    } else {
    }
    %c0 = arith.constant 0 : index
    %c0_1 = arith.constant 0 : index
    %3 = vector.load %arg1[%c0, %c0_1] : memref<16x128xf32, #tpu.memory_space<vmem>>, vector<16x128xf32>
    %c0_2 = arith.constant 0 : index
    %c0_3 = arith.constant 0 : index
    %4 = vector.load %arg2[%c0_2, %c0_3] : memref<16x128xf32, #tpu.memory_space<vmem>>, vector<16x128xf32>
    %cst = arith.constant dense<0xFF800000> : vector<16xf32>
    %5 = vector.multi_reduction <maximumf>, %3, %cst [1] : vector<16x128xf32> to vector<16xf32>
    %6 = vector.shape_cast %5 : vector<16xf32> to vector<16x1xf32>
    %7 = vector.broadcast %6 : vector<16x1xf32> to vector<16x128xf32>
    %8 = arith.subf %3, %7 : vector<16x128xf32>
    %9 = math.exp %8 : vector<16x128xf32>
    %cst_4 = arith.constant dense<0.000000e+00> : vector<16xf32>
    %10 = vector.multi_reduction <add>, %9, %cst_4 [1] : vector<16x128xf32> to vector<16xf32>
    %11 = vector.shape_cast %10 : vector<16xf32> to vector<16x1xf32>
    %12 = math.log %11 : vector<16x1xf32>
    %13 = arith.addf %6, %12 : vector<16x1xf32>
    %14 = tpu.iota {dimensions = array<i32: 1>} : vector<16x128xi32>
    %cst_5 = arith.constant dense<0xFF800000> : vector<16xf32>
    %15 = vector.multi_reduction <maximumf>, %4, %cst_5 [1] : vector<16x128xf32> to vector<16xf32>
    %16 = vector.shape_cast %15 : vector<16xf32> to vector<16x1xf32>
    %17 = vector.broadcast %16 : vector<16x1xf32> to vector<16x128xf32>
    %18 = arith.cmpf oeq, %4, %17 : vector<16x128xf32>
    %c128_i32 = arith.constant 128 : i32
    %19 = vector.broadcast %c128_i32 : i32 to vector<16x128xi32>
    %20 = arith.select %18, %14, %19 : vector<16x128xi1>, vector<16x128xi32>
    %cst_6 = arith.constant dense<2147483647> : vector<16xi32>
    %21 = vector.multi_reduction <minsi>, %20, %cst_6 [1] : vector<16x128xi32> to vector<16xi32>
    %22 = vector.shape_cast %21 : vector<16xi32> to vector<16x1xi32>
    %23 = vector.broadcast %22 : vector<16x1xi32> to vector<16x128xi32>
    %24 = arith.cmpi eq, %14, %23 : vector<16x128xi32>
    %cst_7 = arith.constant 0.000000e+00 : f32
    %25 = vector.broadcast %cst_7 : f32 to vector<16x128xf32>
    %26 = arith.select %24, %3, %25 : vector<16x128xi1>, vector<16x128xf32>
    %cst_8 = arith.constant dense<0.000000e+00> : vector<16xf32>
    %27 = vector.multi_reduction <add>, %26, %cst_8 [1] : vector<16x128xf32> to vector<16xf32>
    %28 = vector.shape_cast %27 : vector<16xf32> to vector<16x1xf32>
    %c16_i32 = arith.constant 16 : i32
    %29 = arith.muli %arg0, %c16_i32 : i32
    %30 = tpu.iota {dimensions = array<i32: 0>} : vector<16x1xi32>
    %31 = vector.broadcast %29 : i32 to vector<16x1xi32>
    %32 = arith.addi %31, %30 : vector<16x1xi32>
    %c10_i32 = arith.constant 10 : i32
    %33 = vector.broadcast %c10_i32 : i32 to vector<16x1xi32>
    %34 = arith.cmpi slt, %32, %33 : vector<16x1xi32>
    %35 = arith.subf %13, %28 : vector<16x1xf32>
    %cst_9 = arith.constant 0.000000e+00 : f32
    %36 = vector.broadcast %cst_9 : f32 to vector<16x1xf32>
    %37 = arith.select %34, %35, %36 : vector<16x1xi1>, vector<16x1xf32>
    %38 = vector.shape_cast %37 : vector<16x1xf32> to vector<1x16x1xf32>
    %cst_10 = arith.constant dense<0.000000e+00> : vector<1xf32>
    %39 = vector.multi_reduction <add>, %38, %cst_10 [1, 2] : vector<1x16x1xf32> to vector<1xf32>
    %40 = vector.shape_cast %39 : vector<1xf32> to vector<1x1x1xf32>
    %41 = vector.extract %40[0, 0, 0] : f32 from vector<1x1x1xf32>
    %c0_11 = arith.constant 0 : index
    %c0_12 = arith.constant 0 : index
    %42 = vector.load %arg4[%c0_11, %c0_12] : memref<1x1xf32, #tpu.memory_space<vmem>>, vector<1x1xf32>
    %43 = vector.broadcast %41 : f32 to vector<1x1xf32>
    %44 = arith.addf %42, %43 : vector<1x1xf32>
    %c0_13 = arith.constant 0 : index
    %c0_14 = arith.constant 0 : index
    %45 = vector.load %arg4[%c0_13, %c0_14] : memref<1x1xf32, #tpu.memory_space<vmem>>, vector<1x1xf32>
    tpu.vector_store %arg4[%c0_13, %c0_14], %44 {strides = array<i32>} : memref<1x1xf32, #tpu.memory_space<vmem>>, vector<1x1xf32>,
    %c0_i32_15 = arith.constant 0 : i32
    %46 = arith.cmpi eq, %arg0, %c0_i32_15 : i32
    %47 = arith.extui %46 : i1 to i32
    %c0_i32_16 = arith.constant 0 : i32
    %48 = arith.cmpi ne, %47, %c0_i32_16 : i32
    scf.if %48 {
      %c0_17 = arith.constant 0 : index
      %c0_18 = arith.constant 0 : index
      %49 = vector.load %arg4[%c0_17, %c0_18] : memref<1x1xf32, #tpu.memory_space<vmem>>, vector<1x1xf32>
      %cst_19 = arith.constant 1.000000e-01 : f32
      %50 = vector.broadcast %cst_19 : f32 to vector<1x1xf32>
      %51 = arith.mulf %49, %50 : vector<1x1xf32>
      %c0_20 = arith.constant 0 : index
      %c0_21 = arith.constant 0 : index
      %52 = vector.load %arg3[%c0_20, %c0_21] : memref<1x1xf32, #tpu.memory_space<vmem>>, vector<1x1xf32>
      tpu.vector_store %arg3[%c0_20, %c0_21], %51 {strides = array<i32>} : memref<1x1xf32, #tpu.memory_space<vmem>>, vector<1x1xf32>,
    } else {
    }
    return
  }
  func.func @transform_0(%arg0: i32) -> (i32, i32) {
    %c0_i32 = arith.constant 0 : i32
    %c0_i32_0 = arith.constant 0 : i32
    return %arg0, %c0_i32 : i32, i32
  }
  func.func @transform_1(%arg0: i32) -> (i32, i32) {
    %c0_i32 = arith.constant 0 : i32
    %c0_i32_0 = arith.constant 0 : i32
    return %arg0, %c0_i32 : i32, i32
  }
  func.func @transform_2(%arg0: i32) -> (i32, i32) {
    %c0_i32 = arith.constant 0 : i32
    %c0_i32_0 = arith.constant 0 : i32
    %c0_i32_1 = arith.constant 0 : i32
    return %c0_i32, %c0_i32_0 : i32, i32
  }
}

</mosaic_0001>

<llo_original>
// kernel: tpu_custom_call.1
$region0: #{tpu_custom_call.1}
  #allocation0 [shape = 'u32[]', space=smem, size = 0x4, offset = 0x4, fixed_abs, tag = 'smem constant byte address 0x4 - core index']
  #allocation1 [shape = 'u32[144,128]{1,0:T(1,128)}', space=vmem, size = 0x12000, scoped, tag = 'internal scratch']
  #allocation2 [shape = 'f32[1,1]{1,0:T(1,128)}', space=vmem, size = 0x200, scoped, tag = 'scratch operand']
  %s0 = inlined_call_operand.hbm [shape: f32[16,128], index: 0, kind: input, shape index: {}]
  %s1 = inlined_call_operand.hbm [shape: f32[16,128], index: 1, kind: input, shape index: {}]
  %s2 = inlined_call_operand.hbm [shape: f32[1,1], index: 2, kind: output, shape index: {}]
  %s3 = sld [smem:[#allocation0]]
  $region34: #{tpu_custom_call.1} parent=0
    _
  %s5 = ssub.s32 1, %s3
  %s6 = scalar_select 0, %s5, %s3
  $region1: #{tpu_custom_call.1} parent=0
    #allocation3 [shape = 'u8[8192]{0}', space=vmem, size = 0x2000, scoped, tag = 'input window, operand 0, single buffered']
    #allocation4 [shape = 's32[1]{0}', space=sflag, size = 0x4, scoped, tag = 'scoped memory for tpu_custom_call.1']
    #allocation5 [shape = 's32[1]{0}', space=sflag, size = 0x4, scoped, tag = 'scoped memory for tpu_custom_call.1']
    #allocation6 [shape = 'u8[8192]{0}', space=vmem, size = 0x2000, scoped, tag = 'input window, operand 1, single buffered']
    #allocation7 [shape = 's32[1]{0}', space=sflag, size = 0x4, scoped, tag = 'scoped memory for tpu_custom_call.1']
    #allocation8 [shape = 'u8[512]{0}', space=vmem, size = 0x400, scoped, tag = 'output window, operand 0, single buffered']
    %7 = vsyncpa [#allocation4], 0
    %8 = vsyncpa [#allocation7], 0
    %9 = vsyncpa [#allocation5], 0
    // Predicated region
    $region2: #{tpu_custom_call.1} parent=1 // pred_check
      _
    $region3: #{tpu_custom_call.1} parent=1 // pred_check_branch
      %11 = sbr.rel (0) target = $region5
    $region4: #{tpu_custom_call.1} parent=1 // pred_region
      %s13 = ssub.s32 256, 256
      %14 = vsyncadd [#allocation4], %s13
      %s15 = sshll.u32 [#allocation3], 4
      %s16 = int_to_ptr.vmem [resolvable:$true] %s15
      %21 = dma.hbm_to_vmem [thread:$0]  %s0, 256, %s16, [#allocation4], 128, 128, 8
    $region5: #{tpu_custom_call.1} parent=1 // pred_fallthru
      _
    // Predicated region
    $region6: #{tpu_custom_call.1} parent=1 // pred_check
      _
    $region7: #{tpu_custom_call.1} parent=1 // pred_check_branch
      %23 = sbr.rel (0) target = $region9
    $region8: #{tpu_custom_call.1} parent=1 // pred_region
      %s25 = ssub.s32 256, 256
      %26 = vsyncadd [#allocation7], %s25
      %s27 = sshll.u32 [#allocation6], 4
      %s28 = int_to_ptr.vmem [resolvable:$true] %s27
      %33 = dma.hbm_to_vmem [thread:$0]  %s1, 256, %s28, [#allocation7], 128, 128, 8
    $region9: #{tpu_custom_call.1} parent=1 // pred_fallthru
      _
    // Predicated region
    $region10: #{tpu_custom_call.1} parent=1 // pred_check
      _
    $region11: #{tpu_custom_call.1} parent=1 // pred_check_branch
      %35 = sbr.rel (0) target = $region13
    $region12: #{tpu_custom_call.1} parent=1 // pred_region
      %36 = dma.done [#allocation4], 256
    $region13: #{tpu_custom_call.1} parent=1 // pred_fallthru
      _
    // Predicated region
    $region14: #{tpu_custom_call.1} parent=1 // pred_check
      _
    $region15: #{tpu_custom_call.1} parent=1 // pred_check_branch
      %38 = sbr.rel (0) target = $region17
    $region16: #{tpu_custom_call.1} parent=1 // pred_region
      %39 = dma.done [#allocation7], 256
    $region17: #{tpu_custom_call.1} parent=1 // pred_fallthru
      _
    %p40 = scmp.eq.s32.totalorder 0, 0
    // Predicated region
    $region18: #{tpu_custom_call.1} parent=1 // pred_check
      %p41 = pneg %p40
    $region19: #{tpu_custom_call.1} parent=1 // pred_check_branch
      %43 = sbr.rel (%p41) target = $region21
    $region20: #{tpu_custom_call.1} parent=1 // pred_region
      %vm44 = vcmask 0
      %45 = vst.msk [vmem:[#allocation2] sm:$0x1] %vm44, 0.0
    $region21: #{tpu_custom_call.1} parent=1 // pred_fallthru
      _
    %v46 = vld [vmem:[#allocation3] sm:$0xff]
    %v47 = vld [vmem:[#allocation3 + $0x8] sm:$0xff]
    %v48 = vld [vmem:[#allocation6] sm:$0xff]
    %v49 = vld [vmem:[#allocation6 + $0x8] sm:$0xff]
    %50 = vmax.xlane.f32.xlu0 %v46
    %v51 = vpop.xlane.xlu0 %50
    %52 = vmax.xlane.f32.xlu0 %v47
    %v53 = vpop.xlane.xlu0 %52
    %v54 = vsub.f32 %v46, %v51
    %v55 = vsub.f32 %v47, %v53
    %v56 = vmul.f32 %v54, 1.442695
    %v57 = vpow.pop %v56
    %v58 = vmul.f32 %v55, 1.442695
    %v59 = vpow.pop %v58
    %60 = vadd.xlane.f32.xlu0 %v57
    %v61 = vpop.xlane.xlu0 %60
    %62 = vadd.xlane.f32.xlu0 %v59
    %v63 = vpop.xlane.xlu0 %62
    %v64 = vlog2.pop %v61
    %v65 = vmul.f32 %v64, 0.6931472
    %v66 = vlog2.pop %v63
    %v67 = vmul.f32 %v66, 0.6931472
    %v68 = vadd.f32 %v51, %v65
    %v69 = vadd.f32 %v53, %v67
    %v70 = vlaneseq
    %v71 = vand.u32 %v70, 127
    %72 = vmax.xlane.f32.xlu0 %v48
    %v73 = vpop.xlane.xlu0 %72
    %74 = vmax.xlane.f32.xlu0 %v49
    %v75 = vpop.xlane.xlu0 %74
    %vm76 = vcmp.eq.f32.partialorder %v48, %v73
    %vm77 = vcmp.eq.f32.partialorder %v49, %v75
    %v78 = vsel %vm76, %v71, 128
    %v79 = vsel %vm77, %v71, 128
    %v80 = vand.u32 %v78, 65535
    %v81 = vshra.s32 %v78, 16
    %v82 = vcvt.s32.f32 %v80
    %v83 = vcvt.s32.f32 %v81
    %84 = vmin.xlane.f32.xlu0 %v83
    %v85 = vpop.xlane.xlu0 %84
    %vm86 = vcmp.eq.f32.partialorder %v83, %v85
    %v87 = vsel %vm86, %v82, inf
    %88 = vmin.xlane.f32.xlu0 %v87
    %v89 = vpop.xlane.xlu0 %88
    %v90 = vcvt.f32.s32 %v89
    %v91 = vcvt.f32.s32 %v85
    %v92 = vshll.u32 %v91, 16
    %v93 = vadd.s32 %v92, %v90
    %v94 = vand.u32 %v79, 65535
    %v95 = vshra.s32 %v79, 16
    %v96 = vcvt.s32.f32 %v94
    %v97 = vcvt.s32.f32 %v95
    %98 = vmin.xlane.f32.xlu0 %v97
    %v99 = vpop.xlane.xlu0 %98
    %vm100 = vcmp.eq.f32.partialorder %v97, %v99
    %v101 = vsel %vm100, %v96, inf
    %102 = vmin.xlane.f32.xlu0 %v101
    %v103 = vpop.xlane.xlu0 %102
    %v104 = vcvt.f32.s32 %v103
    %v105 = vcvt.f32.s32 %v99
    %v106 = vshll.u32 %v105, 16
    %v107 = vadd.s32 %v106, %v104
    %vm108 = vcmp.eq.s32.totalorder %v71, %v93
    %vm109 = vcmp.eq.s32.totalorder %v71, %v107
    %v110 = vsel %vm108, %v46, 0.0
    %v111 = vsel %vm109, %v47, 0.0
    %112 = vadd.xlane.f32.xlu0 %v110
    %v113 = vpop.xlane.xlu0 %112
    %114 = vadd.xlane.f32.xlu0 %v111
    %v115 = vpop.xlane.xlu0 %114
    %s116 = smul.u32 0, 16
    %v117 = vlaneseq
    %v118 = vshrl.u32 %v117, 7
    %v119 = vadd.s32 %v118, 8
    %v120 = vstv %s116
    %v121 = vadd.s32 %v120, %v118
    %v122 = vadd.s32 %v120, %v119
    %vm123 = vcmp.lt.s32.totalorder %v121, 10
    %vm124 = vcmp.lt.s32.totalorder %v122, 10
    %v125 = vsub.f32 %v68, %v113
    %v126 = vsub.f32 %v69, %v115
    %v127 = vsel %vm123, %v125, 0.0
    %v128 = vsel %vm124, %v126, 0.0
    %vm129 = vcmask 7168
    %v130 = vsel %vm129, %v127, 0.0
    %v131 = vsel %vm129, %v128, 0.0
    %v132 = vadd.f32 %v130, %v131
    %133 = vadd.xlane.f32.xlu0 %v132
    %v134 = vpop.xlane.xlu0 %133
    %v135 = vrot.slane %v134, 4
    %v136 = vadd.f32 %v134, %v135
    %v137 = vrot.slane %v136, 2
    %v138 = vadd.f32 %v136, %v137
    %v139 = vrot.slane %v138, 1
    %v140 = vadd.f32 %v138, %v139
    %s141 = vtos %v140
    %v142 = vld [vmem:[#allocation2] sm:$0x1]
    %v143 = vstv %s141
    %v144 = vadd.f32 %v142, %v143
    %vm145 = vcmask 0
    %146 = vst.msk [vmem:[#allocation2] sm:$0x1] %vm145, %v144
    // Predicated region
    $region22: #{tpu_custom_call.1} parent=1 // pred_check
      %p147 = pneg %p40
    $region23: #{tpu_custom_call.1} parent=1 // pred_check_branch
      %149 = sbr.rel (%p147) target = $region25
    $region24: #{tpu_custom_call.1} parent=1 // pred_region
      %v150 = vld [vmem:[#allocation2] sm:$0x1]
      %v151 = vmul.f32 %v150, 0.1
      %152 = vst.msk [vmem:[#allocation8] sm:$0x1] %vm145, %v151
    $region25: #{tpu_custom_call.1} parent=1 // pred_fallthru
      _
    // Predicated region
    $region26: #{tpu_custom_call.1} parent=1 // pred_check
      _
    $region27: #{tpu_custom_call.1} parent=1 // pred_check_branch
      %154 = sbr.rel (0) target = $region29
    $region28: #{tpu_custom_call.1} parent=1 // pred_region
      %s156 = ssub.s32 16, 16
      %157 = vsyncadd [#allocation5], %s156
      %s159 = sshll.u32 [#allocation8], 4
      %s160 = int_to_ptr.vmem [resolvable:$true] %s159
      %162 = dma.vmem_to_hbm [thread:$0]  %s160, 16, %s2, [#allocation5]
    $region29: #{tpu_custom_call.1} parent=1 // pred_fallthru
      _
    // Predicated region
    $region30: #{tpu_custom_call.1} parent=1 // pred_check
      _
    $region31: #{tpu_custom_call.1} parent=1 // pred_check_branch
      %164 = sbr.rel (0) target = $region33
    $region32: #{tpu_custom_call.1} parent=1 // pred_region
      %165 = dma.done [#allocation5], 16
    $region33: #{tpu_custom_call.1} parent=1 // pred_fallthru
      _
    %166 = vsyncpa [#allocation4], 1
    %167 = vsyncpa [#allocation7], 1
    %168 = vsyncpa [#allocation5], 1

</llo_original>
